<compile_context>
chip_gen: v6e
topology: v6e:2x2x1
jax: 0.10.0
libtpu: 0.0.40
codegen_flags: <defaults>
</compile_context>

<pallas_src>
import functools

import jax
import jax.numpy as jnp
from jax.experimental import pallas as pl
from jax.experimental.pallas import tpu as pltpu

_MIB = 1024 * 1024


# ----------------------------------------------------------------------------
# Generation-aware sizing helpers
# ----------------------------------------------------------------------------
def _vmem_capacity_bytes():
    try:
        return int(pltpu.get_tpu_info().vmem_capacity_bytes)
    except Exception:
        return 64 * _MIB  # conservative (v7x per-TC VMEM)


def _vmem_budget():
    """(scoped vmem_limit_bytes, target LN block bytes) for this generation."""
    cap = _vmem_capacity_bytes()
    if cap >= 128 * _MIB:          # v5e / v6e
        return 96 * _MIB, 4 * _MIB
    return 40 * _MIB, 2 * _MIB     # v7x (64 MiB physical per TC)


def _sublane_multiple(dtype):
    # f32 -> 8, bf16 -> 16, int8/fp8 -> 32
    return max(8, 32 // jnp.dtype(dtype).itemsize)


def _pick_row_tile(rows, dim, dtype, target_bytes):
    """Largest row tile (multiple of the sublane tile) near target_bytes."""
    mult = _sublane_multiple(dtype)
    bytes_per_row = max(1, dim * jnp.dtype(dtype).itemsize)
    t = (target_bytes // bytes_per_row) // mult * mult
    t = max(mult, int(t))
    if t >= rows:
        return rows  # full extent (possibly ragged) is always a legal block
    return t


def _pick_fused_row_tile(rows, dim, dtype, target_bytes):
    """Like _pick_row_tile, but floored at an MXU-friendly M (256)."""
    t = _pick_row_tile(rows, dim, dtype, target_bytes)
    if t >= rows:
        return rows
    t = max(t, 256)
    return rows if t >= rows else t


def _pick_col_tile(hidden, dim, w_itemsize, vmem_limit):
    if hidden <= 512:
        return hidden
    # Keep the double-buffered (dim, col_tile) weight slab within ~1/4 of the
    # scoped VMEM budget; never go below a single 128-lane tile.
    for cap in (512, 256, 128):
        if cap == 128 or 2 * dim * cap * w_itemsize <= vmem_limit // 4:
            return cap
    return 128


# ----------------------------------------------------------------------------
# Standalone LayerNorm (for arbitrary fn)
# ----------------------------------------------------------------------------
def _layernorm_kernel(x_ref, g_ref, b_ref, o_ref, *, eps):
    # x_ref: (ROW_TILE, D); g_ref/b_ref: (1, D). Biased variance, torch-style.
    x = x_ref[...].astype(jnp.float32)
    mean = jnp.mean(x, axis=-1, keepdims=True)
    c = x - mean
    var = jnp.mean(c * c, axis=-1, keepdims=True)
    y = c * jax.lax.rsqrt(var + eps) * g_ref[...].astype(jnp.float32) \
        + b_ref[...].astype(jnp.float32)
    o_ref[...] = y.astype(o_ref.dtype)


def layernorm_pallas(x, gamma, beta, *, eps=1e-5, row_tile=None):
    """LayerNorm over the last axis of x (any leading shape), via Pallas."""
    orig_shape = x.shape
    dim = orig_shape[-1]
    rows = 1
    for s in orig_shape[:-1]:
        rows *= s
    x2 = x.reshape(rows, dim)

    vmem_limit, ln_target = _vmem_budget()
    if row_tile is None:
        row_tile = _pick_row_tile(rows, dim, x.dtype, target_bytes=ln_target)
    grid = (pl.cdiv(rows, row_tile),)

    # TODO(synk): for dim < 128, fold several rows into the lane axis to avoid
    # masked partial stores (current kernel is correct but lane-sparse there).
    kernel = functools.partial(_layernorm_kernel, eps=eps)
    out = pl.pallas_call(
        kernel,
        out_shape=jax.ShapeDtypeStruct((rows, dim), x.dtype),
        grid_spec=pltpu.PrefetchScalarGridSpec(
            num_scalar_prefetch=0,
            grid=grid,
            in_specs=[
                pl.BlockSpec((row_tile, dim), lambda i: (i, 0)),
                pl.BlockSpec((1, dim), lambda i: (0, 0)),
                pl.BlockSpec((1, dim), lambda i: (0, 0)),
            ],
            out_specs=pl.BlockSpec((row_tile, dim), lambda i: (i, 0)),
        ),
        compiler_params=pltpu.CompilerParams(
            dimension_semantics=("parallel",),
            vmem_limit_bytes=vmem_limit,
        ),
    )(x2, gamma.reshape(1, dim), beta.reshape(1, dim))
    return out.reshape(orig_shape)


# ----------------------------------------------------------------------------
# Fused PreNorm + Linear
# ----------------------------------------------------------------------------
def _prenorm_linear_kernel(*refs, eps, has_bias, use_scratch):
    if use_scratch:
        *io_refs, y_scr = refs
    else:
        io_refs, y_scr = refs, None
    if has_bias:
        x_ref, g_ref, b_ref, w_ref, bias_ref, o_ref = io_refs
    else:
        x_ref, g_ref, b_ref, w_ref, o_ref = io_refs
        bias_ref = None

    def _norm():
        x = x_ref[...].astype(jnp.float32)
        mean = jnp.mean(x, axis=-1, keepdims=True)
        c = x - mean
        var = jnp.mean(c * c, axis=-1, keepdims=True)
        return c * jax.lax.rsqrt(var + eps) * g_ref[...].astype(jnp.float32) \
            + b_ref[...].astype(jnp.float32)

    if use_scratch:
        # LN is computed only on the first column tile of each row tile and
        # cached in VMEM (already in the MXU input dtype) for all j > 0.
        @pl.when(pl.program_id(1) == 0)
        def _():
            y_scr[...] = _norm().astype(y_scr.dtype)
        y = y_scr[...]
    else:
        y = _norm().astype(w_ref.dtype)

    # Weight stays in its native dtype (bf16 weights -> bf16 MXU path);
    # accumulate in f32 on the MXU.
    out = jnp.dot(y, w_ref[...], preferred_element_type=jnp.float32)
    if has_bias:
        out = out + bias_ref[...].astype(jnp.float32)
    o_ref[...] = out.astype(o_ref.dtype)


def prenorm_linear_pallas(x, gamma, beta, weight, bias=None, *, eps=1e-5,
                          row_tile=None, col_tile=None, compute_dtype=None):
    """Fused y = LayerNorm(x) @ weight (+ bias); x has any leading shape."""
    orig_shape = x.shape
    dim = orig_shape[-1]
    hidden = weight.shape[-1]
    rows = 1
    for s in orig_shape[:-1]:
        rows *= s
    x2 = x.reshape(rows, dim)

    vmem_limit, _ = _vmem_budget()

    # Optional one-time host-side cast (e.g. f32 -> bf16) so both the HBM
    # traffic and the MXU path use the cheaper dtype.
    if compute_dtype is not None and weight.dtype != jnp.dtype(compute_dtype):
        weight = weight.astype(compute_dtype)
    w_itemsize = jnp.dtype(weight.dtype).itemsize

    if row_tile is None:
        row_tile = _pick_fused_row_tile(rows, dim, x.dtype,
                                        target_bytes=2 * _MIB)

    # Weight-resident path: if the (double-buffered) full weight fits a slice
    # of the VMEM budget, keep it resident (constant block index => DMA once).
    w_bytes = dim * hidden * w_itemsize
    if col_tile is None:
        if 2 * w_bytes <= vmem_limit // 3:
            col_tile = hidden
        else:
            col_tile = _pick_col_tile(hidden, dim, w_itemsize, vmem_limit)

    has_bias = bias is not None
    n_i = pl.cdiv(rows, row_tile)
    n_j = pl.cdiv(hidden, col_tile)
    use_scratch = n_j > 1  # only cache LN when there is a column loop

    in_specs = [
        pl.BlockSpec((row_tile, dim), lambda i, j: (i, 0)),
        pl.BlockSpec((1, dim), lambda i, j: (0, 0)),
        pl.BlockSpec((1, dim), lambda i, j: (0, 0)),
        pl.BlockSpec((dim, col_tile), lambda i, j: (0, j)),
    ]
    args = [x2, gamma.reshape(1, dim), beta.reshape(1, dim), weight]
    if has_bias:
        in_specs.append(pl.BlockSpec((1, col_tile), lambda i, j: (0, j)))
        args.append(bias.reshape(1, hidden))

    scratch_shapes = []
    if use_scratch:
        scratch_shapes.append(pltpu.VMEM((row_tile, dim), weight.dtype))

    # TODO(synk): add a K-reduction grid axis for very large `dim` where a
    # whole (dim, col_tile) weight slab no longer fits comfortably in VMEM.
    kernel = functools.partial(_prenorm_linear_kernel, eps=eps,
                               has_bias=has_bias, use_scratch=use_scratch)
    out = pl.pallas_call(
        kernel,
        out_shape=jax.ShapeDtypeStruct((rows, hidden), x.dtype),
        grid_spec=pltpu.PrefetchScalarGridSpec(
            num_scalar_prefetch=0,
            grid=(n_i, n_j),
            in_specs=in_specs,
            out_specs=pl.BlockSpec((row_tile, col_tile), lambda i, j: (i, j)),
            scratch_shapes=scratch_shapes,
        ),
        compiler_params=pltpu.CompilerParams(
            # rows parallel (megacore), columns arbitrary: keeps x traffic /
            # LN compute unduplicated and makes the j==0 scratch reuse valid.
            dimension_semantics=("parallel", "arbitrary"),
            vmem_limit_bytes=vmem_limit,
        ),
    )(*args)
    return out.reshape(orig_shape[:-1] + (hidden,))


# ----------------------------------------------------------------------------
# Module-level wrappers (JAX port of the PyTorch PreNorm)
# ----------------------------------------------------------------------------
class LinearFn:
    """fn(x) = x @ weight (+ bias).  Exposing the weight lets PreNorm fuse the
    LayerNorm with the projection inside a single pallas_call.  Store bf16
    weights (or set compute_dtype=jnp.bfloat16) to use the bf16 MXU path."""

    def __init__(self, weight, bias=None, compute_dtype=None):
        self.weight = weight
        self.bias = bias
        self.compute_dtype = compute_dtype

    def __call__(self, x):
        w = self.weight
        if self.compute_dtype is not None:
            w = w.astype(self.compute_dtype)
        y = x @ w
        if self.bias is not None:
            y = y + self.bias
        return y


class PreNorm:
    """JAX port of the PyTorch PreNorm module: y = fn(LayerNorm(dim)(x), ...)."""

    def __init__(self, dim, fn, eps=1e-5):
        self.dim = dim
        self.fn = fn
        # nn.LayerNorm default init: weight=1, bias=0, eps=1e-5
        self.gamma = jnp.ones((dim,), jnp.float32)
        self.beta = jnp.zeros((dim,), jnp.float32)
        self.eps = eps

    def __call__(self, x, *args, **kwargs):
        if isinstance(self.fn, LinearFn) and not args and not kwargs:
            # Fused LN + matmul: avoids writing normalized activations to HBM
            # and re-reading them inside fn.
            return prenorm_linear_pallas(x, self.gamma, self.beta,
                                         self.fn.weight, self.fn.bias,
                                         eps=self.eps,
                                         compute_dtype=self.fn.compute_dtype)
        y = layernorm_pallas(x, self.gamma, self.beta, eps=self.eps)
        return self.fn(y, *args, **kwargs)


if __name__ == "__main__":
    key = jax.random.PRNGKey(0)
    k_x, k_w, k_b, k_w2 = jax.random.split(key, 4)

    # Lane-dense trailing dims (multiples of 128) so stores are unmasked.
    batch, seq, dim, hidden = 2, 8, 128, 128
    x = jax.random.normal(k_x, (batch, seq, dim), dtype=jnp.float32)
    W = jax.random.normal(k_w, (dim, hidden), dtype=jnp.float32) * 0.02
    b_lin = jax.random.normal(k_b, (hidden,), dtype=jnp.float32) * 0.1

    # Pure-JAX reference LayerNorm (torch semantics: biased var, eps in sqrt).
    mean = jnp.mean(x, axis=-1, keepdims=True)
    var = jnp.mean((x - mean) ** 2, axis=-1, keepdims=True)
    x_ln = (x - mean) * jax.lax.rsqrt(var + 1e-5)

    # 1) Fused path, f32 weights + bias (weight-resident, no column loop).
    fused = PreNorm(dim, LinearFn(W, b_lin))
    out_fused = fused(x)
    jax.block_until_ready(out_fused)
    ref_fused = x_ln @ W + b_lin
    assert out_fused.shape == (batch, seq, hidden)
    assert jnp.allclose(out_fused, ref_fused, atol=1e-4, rtol=1e-4)

    # 2) Fused path, bf16 weights, no bias (bf16 MXU path, f32 accumulation).
    Wb = W.astype(jnp.bfloat16)
    fused_bf16 = PreNorm(dim, LinearFn(Wb))
    out_bf16 = fused_bf16(x)
    jax.block_until_ready(out_bf16)
    ref_bf16 = jnp.dot(x_ln.astype(jnp.bfloat16), Wb,
                       preferred_element_type=jnp.float32)
    assert out_bf16.shape == (batch, seq, hidden)
    assert jnp.allclose(out_bf16, ref_bf16, atol=2e-2, rtol=2e-2)

    # 3) Fused path, forced column tiling (exercises the LN-cache scratch).
    hidden2 = 256
    W2 = jax.random.normal(k_w2, (dim, hidden2), dtype=jnp.float32) * 0.02
    out_tiled = prenorm_linear_pallas(x, jnp.ones((dim,), jnp.float32),
                                      jnp.zeros((dim,), jnp.float32),
                                      W2, col_tile=128)
    jax.block_until_ready(out_tiled)
    ref_tiled = x_ln @ W2
    assert out_tiled.shape == (batch, seq, hidden2)
    assert jnp.allclose(out_tiled, ref_tiled, atol=1e-4, rtol=1e-4)

    # 4) General path: arbitrary fn -> standalone LayerNorm kernel + JAX fn.
    general = PreNorm(dim, lambda t: jnp.tanh(t) * 0.5)
    out_gen = general(x)
    jax.block_until_ready(out_gen)
    ref_gen = jnp.tanh(x_ln) * 0.5
    assert out_gen.shape == (batch, seq, dim)
    assert jnp.allclose(out_gen, ref_gen, atol=1e-4, rtol=1e-4)

    print("KERNEL_OK")
</pallas_src>

<mosaic_0001>
module attributes {stable_mosaic.version = 11 : i64} {
  func.func @_prenorm_linear_kernel(%arg0: i32, %arg1: i32, %arg2: memref<16x128xf32, #tpu.memory_space<vmem>>, %arg3: memref<1x128xf32, #tpu.memory_space<vmem>>, %arg4: memref<1x128xf32, #tpu.memory_space<vmem>>, %arg5: memref<128x128xf32, #tpu.memory_space<vmem>>, %arg6: memref<1x128xf32, #tpu.memory_space<vmem>>, %arg7: memref<16x128xf32, #tpu.memory_space<vmem>>) attributes {dimension_semantics = [#tpu.dimension_semantics<parallel>, #tpu.dimension_semantics<arbitrary>], iteration_bounds = array<i64: 1, 1>, scalar_prefetch = 0 : i64, scratch_operands = 0 : i64, tpu.core_type = #tpu.core_type<tc>, window_params = [{transform_indices = @transform_0, window_bounds = array<i64: 16, 128>}, {pipeline_mode = #tpu.pipeline_mode<synchronous>, transform_indices = @transform_1, window_bounds = array<i64: 1, 128>}, {pipeline_mode = #tpu.pipeline_mode<synchronous>, transform_indices = @transform_2, window_bounds = array<i64: 1, 128>}, {transform_indices = @transform_3, window_bounds = array<i64: 128, 128>}, {transform_indices = @transform_4, window_bounds = array<i64: 1, 128>}, {transform_indices = @transform_5, window_bounds = array<i64: 16, 128>}]} {
    %c0 = arith.constant 0 : index
    %c0_0 = arith.constant 0 : index
    %0 = vector.load %arg2[%c0, %c0_0] : memref<16x128xf32, #tpu.memory_space<vmem>>, vector<16x128xf32>
    %cst = arith.constant dense<0.000000e+00> : vector<16xf32>
    %1 = vector.multi_reduction <add>, %0, %cst [1] : vector<16x128xf32> to vector<16xf32>
    %2 = vector.shape_cast %1 : vector<16xf32> to vector<16x1xf32>
    %cst_1 = arith.constant 1.280000e+02 : f32
    %3 = vector.broadcast %cst_1 : f32 to vector<16x1xf32>
    %4 = arith.divf %2, %3 : vector<16x1xf32>
    %5 = vector.broadcast %4 : vector<16x1xf32> to vector<16x128xf32>
    %6 = arith.subf %0, %5 : vector<16x128xf32>
    %7 = arith.mulf %6, %6 : vector<16x128xf32>
    %cst_2 = arith.constant dense<0.000000e+00> : vector<16xf32>
    %8 = vector.multi_reduction <add>, %7, %cst_2 [1] : vector<16x128xf32> to vector<16xf32>
    %9 = vector.shape_cast %8 : vector<16xf32> to vector<16x1xf32>
    %cst_3 = arith.constant 1.280000e+02 : f32
    %10 = vector.broadcast %cst_3 : f32 to vector<16x1xf32>
    %11 = arith.divf %9, %10 : vector<16x1xf32>
    %cst_4 = arith.constant 9.99999974E-6 : f32
    %12 = vector.broadcast %cst_4 : f32 to vector<16x1xf32>
    %13 = arith.addf %11, %12 : vector<16x1xf32>
    %14 = math.rsqrt %13 : vector<16x1xf32>
    %15 = vector.broadcast %14 : vector<16x1xf32> to vector<16x128xf32>
    %16 = arith.mulf %6, %15 : vector<16x128xf32>
    %c0_5 = arith.constant 0 : index
    %c0_6 = arith.constant 0 : index
    %17 = vector.load %arg3[%c0_5, %c0_6] : memref<1x128xf32, #tpu.memory_space<vmem>>, vector<1x128xf32>
    %18 = vector.broadcast %17 : vector<1x128xf32> to vector<16x128xf32>
    %19 = arith.mulf %16, %18 : vector<16x128xf32>
    %c0_7 = arith.constant 0 : index
    %c0_8 = arith.constant 0 : index
    %20 = vector.load %arg4[%c0_7, %c0_8] : memref<1x128xf32, #tpu.memory_space<vmem>>, vector<1x128xf32>
    %21 = vector.broadcast %20 : vector<1x128xf32> to vector<16x128xf32>
    %22 = arith.addf %19, %21 : vector<16x128xf32>
    %c0_9 = arith.constant 0 : index
    %c0_10 = arith.constant 0 : index
    %23 = vector.load %arg5[%c0_9, %c0_10] : memref<128x128xf32, #tpu.memory_space<vmem>>, vector<128x128xf32>
    %cst_11 = arith.constant dense<0.000000e+00> : vector<16x128xf32>
    %24 = tpu.matmul %22, %23, %cst_11 {dimension_numbers = #tpu.dot_dimension_numbers<[1], [0], [0], [1], [0, 0, 1, 1], [], []>} : vector<16x128xf32>, vector<128x128xf32>, vector<16x128xf32> -> vector<16x128xf32>
    %c0_12 = arith.constant 0 : index
    %c0_13 = arith.constant 0 : index
    %25 = vector.load %arg6[%c0_12, %c0_13] : memref<1x128xf32, #tpu.memory_space<vmem>>, vector<1x128xf32>
    %26 = vector.broadcast %25 : vector<1x128xf32> to vector<16x128xf32>
    %27 = arith.addf %24, %26 : vector<16x128xf32>
    %c0_14 = arith.constant 0 : index
    %c0_15 = arith.constant 0 : index
    %28 = vector.load %arg7[%c0_14, %c0_15] : memref<16x128xf32, #tpu.memory_space<vmem>>, vector<16x128xf32>
    tpu.vector_store %arg7[%c0_14, %c0_15], %27 {strides = array<i32>} : memref<16x128xf32, #tpu.memory_space<vmem>>, vector<16x128xf32>,
    return
  }
  func.func @transform_0(%arg0: i32, %arg1: i32) -> (i32, i32) {
    %c0_i32 = arith.constant 0 : i32
    %c0_i32_0 = arith.constant 0 : i32
    return %arg0, %c0_i32 : i32, i32
  }
  func.func @transform_1(%arg0: i32, %arg1: i32) -> (i32, i32) {
    %c0_i32 = arith.constant 0 : i32
    %c0_i32_0 = arith.constant 0 : i32
    %c0_i32_1 = arith.constant 0 : i32
    return %c0_i32, %c0_i32_0 : i32, i32
  }
  func.func @transform_2(%arg0: i32, %arg1: i32) -> (i32, i32) {
    %c0_i32 = arith.constant 0 : i32
    %c0_i32_0 = arith.constant 0 : i32
    %c0_i32_1 = arith.constant 0 : i32
    return %c0_i32, %c0_i32_0 : i32, i32
  }
  func.func @transform_3(%arg0: i32, %arg1: i32) -> (i32, i32) {
    %c0_i32 = arith.constant 0 : i32
    %c0_i32_0 = arith.constant 0 : i32
    return %c0_i32, %arg1 : i32, i32
  }
  func.func @transform_4(%arg0: i32, %arg1: i32) -> (i32, i32) {
    %c0_i32 = arith.constant 0 : i32
    %c0_i32_0 = arith.constant 0 : i32
    return %c0_i32, %arg1 : i32, i32
  }
  func.func @transform_5(%arg0: i32, %arg1: i32) -> (i32, i32) {
    %c0_i32 = arith.constant 0 : i32
    return %arg0, %arg1 : i32, i32
  }
}

</mosaic_0001>

<llo_original>
// kernel: tpu_custom_call.1
$region0: #{tpu_custom_call.1}
  #allocation0 [shape = 'u32[]', space=smem, size = 0x4, offset = 0x4, fixed_abs, tag = 'smem constant byte address 0x4 - core index']
  #allocation1 [shape = 'u32[144,128]{1,0:T(1,128)}', space=vmem, size = 0x12000, scoped, tag = 'internal scratch']
  %s0 = inlined_call_operand.hbm [shape: f32[16,128], index: 0, kind: input, shape index: {}]
  %s1 = inlined_call_operand.vmem [shape: f32[1,128], index: 1, kind: input, shape index: {}]
  %s2 = inlined_call_operand.vmem [shape: f32[1,128], index: 2, kind: input, shape index: {}]
  %s3 = inlined_call_operand.hbm [shape: f32[128,128], index: 3, kind: input, shape index: {}]
  %s4 = inlined_call_operand.vmem [shape: f32[1,128], index: 4, kind: input, shape index: {}]
  %s5 = inlined_call_operand.hbm [shape: f32[16,128], index: 5, kind: output, shape index: {}]
  %s6 = sld [smem:[#allocation0]]
  $region38: #{tpu_custom_call.1} parent=0
    _
  %s8 = ssub.s32 1, %s6
  %s9 = scalar_select 0, %s8, %s6
  $region1: #{tpu_custom_call.1} parent=0
    #allocation2 [shape = 'u8[8192]{0}', space=vmem, size = 0x2000, scoped, tag = 'input window, operand 0, single buffered']
    #allocation3 [shape = 's32[1]{0}', space=sflag, size = 0x4, scoped, tag = 'scoped memory for tpu_custom_call.1']
    #allocation4 [shape = 's32[1]{0}', space=sflag, size = 0x4, scoped, tag = 'scoped memory for tpu_custom_call.1']
    #allocation5 [shape = 'u8[65536]{0}', space=vmem, size = 0x10000, scoped, tag = 'input window, operand 3, single buffered']
    #allocation6 [shape = 's32[1]{0}', space=sflag, size = 0x4, scoped, tag = 'scoped memory for tpu_custom_call.1']
    #allocation7 [shape = 'u8[8192]{0}', space=vmem, size = 0x2000, scoped, tag = 'output window, operand 0, single buffered']
    %10 = vsyncpa [#allocation3], 0
    %11 = vsyncpa [#allocation6], 0
    %12 = vsyncpa [#allocation4], 0
    // Predicated region
    $region2: #{tpu_custom_call.1} parent=1 // pred_check
      _
    $region3: #{tpu_custom_call.1} parent=1 // pred_check_branch
      %14 = sbr.rel (0) target = $region5
    $region4: #{tpu_custom_call.1} parent=1 // pred_region
      %s16 = ssub.s32 256, 256
      %17 = vsyncadd [#allocation3], %s16
      %s18 = sshll.u32 [#allocation2], 4
      %s19 = int_to_ptr.vmem [resolvable:$true] %s18
      %24 = dma.hbm_to_vmem [thread:$0]  %s0, 256, %s19, [#allocation3], 128, 128, 8
    $region5: #{tpu_custom_call.1} parent=1 // pred_fallthru
      _
    // Predicated region
    $region6: #{tpu_custom_call.1} parent=1 // pred_check
      _
    $region7: #{tpu_custom_call.1} parent=1 // pred_check_branch
      %26 = sbr.rel (0) target = $region9
    $region8: #{tpu_custom_call.1} parent=1 // pred_region
      _
    $region9: #{tpu_custom_call.1} parent=1 // pred_fallthru
      _
    // Predicated region
    $region10: #{tpu_custom_call.1} parent=1 // pred_check
      _
    $region11: #{tpu_custom_call.1} parent=1 // pred_check_branch
      %28 = sbr.rel (0) target = $region13
    $region12: #{tpu_custom_call.1} parent=1 // pred_region
      _
    $region13: #{tpu_custom_call.1} parent=1 // pred_fallthru
      _
    // Predicated region
    $region14: #{tpu_custom_call.1} parent=1 // pred_check
      _
    $region15: #{tpu_custom_call.1} parent=1 // pred_check_branch
      %30 = sbr.rel (0) target = $region17
    $region16: #{tpu_custom_call.1} parent=1 // pred_region
      %s32 = ssub.s32 2048, 2048
      %33 = vsyncadd [#allocation6], %s32
      %s34 = sshll.u32 [#allocation5], 4
      %s35 = int_to_ptr.vmem [resolvable:$true] %s34
      %40 = dma.hbm_to_vmem [thread:$0]  %s3, 2048, %s35, [#allocation6], 128, 128, 8
    $region17: #{tpu_custom_call.1} parent=1 // pred_fallthru
      _
    // Predicated region
    $region18: #{tpu_custom_call.1} parent=1 // pred_check
      _
    $region19: #{tpu_custom_call.1} parent=1 // pred_check_branch
      %42 = sbr.rel (0) target = $region21
    $region20: #{tpu_custom_call.1} parent=1 // pred_region
      _
    $region21: #{tpu_custom_call.1} parent=1 // pred_fallthru
      _
    // Predicated region
    $region22: #{tpu_custom_call.1} parent=1 // pred_check
      _
    $region23: #{tpu_custom_call.1} parent=1 // pred_check_branch
      %44 = sbr.rel (0) target = $region25
    $region24: #{tpu_custom_call.1} parent=1 // pred_region
      %45 = dma.done [#allocation3], 256
    $region25: #{tpu_custom_call.1} parent=1 // pred_fallthru
      _
    // Predicated region
    $region26: #{tpu_custom_call.1} parent=1 // pred_check
      _
    $region27: #{tpu_custom_call.1} parent=1 // pred_check_branch
      %47 = sbr.rel (0) target = $region29
    $region28: #{tpu_custom_call.1} parent=1 // pred_region
      %48 = dma.done [#allocation6], 2048
    $region29: #{tpu_custom_call.1} parent=1 // pred_fallthru
      _
    %v49 = vld [vmem:[#allocation2] sm:$0xff]
    %v50 = vld [vmem:[#allocation2 + $0x8] sm:$0xff]
    %51 = vadd.xlane.f32.xlu0 %v49
    %v52 = vpop.xlane.xlu0 %51
    %53 = vadd.xlane.f32.xlu0 %v50
    %v54 = vpop.xlane.xlu0 %53
    %v55 = vrcp.pop 128.0
    %v56 = vmul.f32 %v52, %v55
    %v57 = vmul.f32 %v54, %v55
    %v58 = vsub.f32 %v49, %v56
    %v59 = vsub.f32 %v50, %v57
    %v60 = vmul.f32 %v58, %v58
    %v61 = vmul.f32 %v59, %v59
    %62 = vadd.xlane.f32.xlu0 %v60
    %v63 = vpop.xlane.xlu0 %62
    %64 = vadd.xlane.f32.xlu0 %v61
    %v65 = vpop.xlane.xlu0 %64
    %v66 = vmul.f32 %v63, %v55
    %v67 = vmul.f32 %v65, %v55
    %v68 = vadd.f32 %v66, 1e-05
    %v69 = vadd.f32 %v67, 1e-05
    %v70 = vrsqrt.pop %v68
    %v71 = vrsqrt.pop %v69
    %v72 = vmul.f32 %v58, %v70
    %v73 = vmul.f32 %v59, %v71
    %v74 = vld [vmem:[%s1] sm:$0x1]
    %v76 = vlaneseq
    %v77 = vshrl.u32 %v76, 7
    %v78 = vsub.s32 0, %v77
    %v79 = vrot.slane %v74, %v78
    %v81 = vmul.f32 %v72, %v79
    %v82 = vmul.f32 %v73, %v79
    %v83 = vld [vmem:[%s2] sm:$0x1]
    %v85 = vlaneseq
    %v86 = vshrl.u32 %v85, 7
    %v87 = vsub.s32 0, %v86
    %v88 = vrot.slane %v83, %v87
    %v90 = vadd.f32 %v81, %v88
    %v91 = vadd.f32 %v82, %v88
    %v92 = vld [vmem:[#allocation5] sm:$0xff]
    %v93 = vld [vmem:[#allocation5 + $0x8] sm:$0xff]
    %v94 = vld [vmem:[#allocation5 + $0x10] sm:$0xff]
    %v95 = vld [vmem:[#allocation5 + $0x18] sm:$0xff]
    %v96 = vld [vmem:[#allocation5 + $0x20] sm:$0xff]
    %v97 = vld [vmem:[#allocation5 + $0x28] sm:$0xff]
    %v98 = vld [vmem:[#allocation5 + $0x30] sm:$0xff]
    %v99 = vld [vmem:[#allocation5 + $0x38] sm:$0xff]
    %v100 = vld [vmem:[#allocation5 + $0x40] sm:$0xff]
    %v101 = vld [vmem:[#allocation5 + $0x48] sm:$0xff]
    %v102 = vld [vmem:[#allocation5 + $0x50] sm:$0xff]
    %v103 = vld [vmem:[#allocation5 + $0x58] sm:$0xff]
    %v104 = vld [vmem:[#allocation5 + $0x60] sm:$0xff]
    %v105 = vld [vmem:[#allocation5 + $0x68] sm:$0xff]
    %v106 = vld [vmem:[#allocation5 + $0x70] sm:$0xff]
    %v107 = vld [vmem:[#allocation5 + $0x78] sm:$0xff]
    %v108 = vld [vmem:[%s4] sm:$0x1]
    %v110 = vlaneseq
    %v111 = vshrl.u32 %v110, 7
    %v112 = vsub.s32 0, %v111
    %v113 = vrot.slane %v108, %v112
    %115 = vmatprep.subr.mxu0 0.0
    %116 = vmatpush1.msra.mxu0 %v107
    %117 = vmatprep.subr.mxu0 0.0
    %118 = vmatpush1.msra.mxu0 %v106
    %119 = vmatprep.subr.mxu0 0.0
    %120 = vmatpush1.msra.mxu0 %v105
    %121 = vmatprep.subr.mxu0 0.0
    %122 = vmatpush1.msra.mxu0 %v104
    %123 = vmatprep.subr.mxu0 0.0
    %124 = vmatpush1.msra.mxu0 %v103
    %125 = vmatprep.subr.mxu0 0.0
    %126 = vmatpush1.msra.mxu0 %v102
    %127 = vmatprep.subr.mxu0 0.0
    %128 = vmatpush1.msra.mxu0 %v101
    %129 = vmatprep.subr.mxu0 0.0
    %130 = vmatpush1.msra.mxu0 %v100
    %131 = vmatprep.subr.mxu0 0.0
    %132 = vmatpush1.msra.mxu0 %v99
    %133 = vmatprep.subr.mxu0 0.0
    %134 = vmatpush1.msra.mxu0 %v98
    %135 = vmatprep.subr.mxu0 0.0
    %136 = vmatpush1.msra.mxu0 %v97
    %137 = vmatprep.subr.mxu0 0.0
    %138 = vmatpush1.msra.mxu0 %v96
    %139 = vmatprep.subr.mxu0 0.0
    %140 = vmatpush1.msra.mxu0 %v95
    %141 = vmatprep.subr.mxu0 0.0
    %142 = vmatpush1.msra.mxu0 %v94
    %143 = vmatprep.subr.mxu0 0.0
    %144 = vmatpush1.msra.mxu0 %v93
    %145 = vmatprep.subr.mxu0 0.0
    %146 = vmatpush1.msra.mxu0 %v92
    %147 = vmatprep.subr.mxu0 0.0
    %148 = vmatpush2.msra.mxu0 0.0
    %149 = vmatprep.subr.mxu0 0.0
    %150 = vmatpush2.msra.mxu0 0.0
    %151 = vmatprep.subr.mxu0 0.0
    %152 = vmatpush2.msra.mxu0 0.0
    %153 = vmatprep.subr.mxu0 0.0
    %154 = vmatpush2.msra.mxu0 0.0
    %155 = vmatprep.subr.mxu0 0.0
    %156 = vmatpush2.msra.mxu0 0.0
    %157 = vmatprep.subr.mxu0 0.0
    %158 = vmatpush2.msra.mxu0 0.0
    %159 = vmatprep.subr.mxu0 0.0
    %160 = vmatpush2.msra.mxu0 0.0
    %161 = vmatprep.subr.mxu0 0.0
    %162 = vmatpush2.msra.mxu0 0.0
    %163 = vmatprep.subr.mxu0 0.0
    %164 = vmatpush2.msra.mxu0 0.0
    %165 = vmatprep.subr.mxu0 0.0
    %166 = vmatpush2.msra.mxu0 0.0
    %167 = vmatprep.subr.mxu0 0.0
    %168 = vmatpush2.msra.mxu0 0.0
    %169 = vmatprep.subr.mxu0 0.0
    %170 = vmatpush2.msra.mxu0 0.0
    %171 = vmatprep.subr.mxu0 0.0
    %172 = vmatpush2.msra.mxu0 0.0
    %173 = vmatprep.subr.mxu0 0.0
    %174 = vmatpush2.msra.mxu0 0.0
    %175 = vmatprep.subr.mxu0 0.0
    %176 = vmatpush2.msra.mxu0 0.0
    %177 = vmatprep.subr.mxu0 0.0
    %178 = vmatpush2.msra.mxu0 0.0
    %179 = vmatprep.mubr.f32.mxu0 0.0
    %180 = vmatmul.mubr.f32.gmra.mxu0 %v90
    %v181 = vpop.f32.mrf.mxu0
    %v182 = vadd.f32 %v113, %v181
    %v183 = vpop.f32.mrf.mxu0
    %184 = vmatprep.mubr.f32.mxu0 0.0
    %185 = vmatmul.mubr.f32.gmra.mxu0 %v91
    %v186 = vpop.f32.mrf.mxu0
    %v187 = vadd.f32 %v113, %v186
    %v188 = vpop.f32.mrf.mxu0
    %189 = vdwg.mxu0
    %190 = vst [vmem:[#allocation7] sm:$0xff] %v182
    %191 = vst [vmem:[#allocation7 + $0x8] sm:$0xff] %v187
    // Predicated region
    $region30: #{tpu_custom_call.1} parent=1 // pred_check
      _
    $region31: #{tpu_custom_call.1} parent=1 // pred_check_branch
      %193 = sbr.rel (0) target = $region33
    $region32: #{tpu_custom_call.1} parent=1 // pred_region
      %s195 = ssub.s32 256, 256
      %196 = vsyncadd [#allocation4], %s195
      %s197 = sshll.u32 [#allocation7], 4
      %s198 = int_to_ptr.vmem [resolvable:$true] %s197
      %203 = dma.vmem_to_hbm [thread:$0]  %s198, 256, %s5, [#allocation4], 128, 128, 8
    $region33: #{tpu_custom_call.1} parent=1 // pred_fallthru
      _
    // Predicated region
    $region34: #{tpu_custom_call.1} parent=1 // pred_check
      _
    $region35: #{tpu_custom_call.1} parent=1 // pred_check_branch
      %205 = sbr.rel (0) target = $region37
    $region36: #{tpu_custom_call.1} parent=1 // pred_region
      %206 = dma.done [#allocation4], 256
    $region37: #{tpu_custom_call.1} parent=1 // pred_fallthru
      _
    %207 = vsyncpa [#allocation3], 1
    %208 = vsyncpa [#allocation6], 1
    %209 = vsyncpa [#allocation4], 1

</llo_original>
